<compile_context>
chip_gen: v6e
topology: v6e:2x2x1
jax: 0.10.0
libtpu: 0.0.40
codegen_flags: <defaults>
</compile_context>

<pallas_src>
import functools

import jax
import jax.numpy as jnp
from jax.experimental import pallas as pl
from jax.experimental.pallas import tpu as pltpu


def _refle_conv_act_kernel(x_ref, w0_ref, w1_ref, w2_ref, b_ref, o_ref, *,
                           Nb, H, last):
    """One grid step: Nb images, all H rows at once.

    x_ref : (Nb, H, W*Cin)   unpadded input slab, channels fastest (lanes)
    w*_ref: (W*Cin, W*Cout)  per-dy banded weights (W-reflection folded in)
    b_ref : (1, W*Cout)      bias tiled across W
    o_ref : (Nb, H, W*Cout)  lane-dense output slab
    """
    wcin = x_ref.shape[-1]
    wcout = o_ref.shape[-1]
    m = Nb * H

    # Contiguous collapse of leading dims -> no relayout.
    x = x_ref[...].reshape(m, wcin)

    # Three aligned MXU matmuls (one per vertical tap dy).  No operand
    # relayout; extra MXU pushes are essentially free at these sizes.
    y0 = jnp.dot(x, w0_ref[...], preferred_element_type=jnp.float32)
    y1 = jnp.dot(x, w1_ref[...], preferred_element_type=jnp.float32)
    y2 = jnp.dot(x, w2_ref[...], preferred_element_type=jnp.float32)

    # Combine on the output side:
    #   out[h] = Y0[refl(h-1)] + Y1[h] + Y2[refl(h+1)] + bias
    # Sublane rolls give the +-1 row shifts; a select on (row mod H) applies
    # the per-image reflected boundary (rows 0 and H-1) and also cancels the
    # wrap-around between images stacked in the M dimension.
    row = jax.lax.broadcasted_iota(jnp.int32, (m, 1), 0)
    local = row % H
    top = local == 0
    bot = local == (H - 1)

    y0_dn = pltpu.roll(y0, shift=1, axis=0)        # row r -> Y0[r-1]
    y0_up = pltpu.roll(y0, shift=m - 1, axis=0)    # row r -> Y0[r+1]
    y2_up = pltpu.roll(y2, shift=m - 1, axis=0)    # row r -> Y2[r+1]
    y2_dn = pltpu.roll(y2, shift=1, axis=0)        # row r -> Y2[r-1]

    a = jnp.where(top, y0_up, y0_dn)   # reflected row -1 -> row 1
    c = jnp.where(bot, y2_dn, y2_up)   # reflected row H  -> row H-2

    acc = a + y1 + c + b_ref[...]      # f32 epilogue (v5e has no bf16 VPU/EUP)
    act = jnp.tanh(acc) if last else jnp.maximum(acc, 0.0)
    o_ref[...] = act.astype(o_ref.dtype).reshape(Nb, H, wcout)


def _band_weights(weight, W):
    """(3, 3, Cin, Cout) HWIO -> three (W*Cin, W*Cout) banded row-conv weights.

    For each vertical tap dy:
        Wband_dy[u*Cin + c, w*Cout + o] = sum_{dx : refl_W(w+dx-1) == u} weight[dy, dx, c, o]
    i.e. the horizontal 3-tap conv AND the width-direction reflection pad are
    folded into a banded matmul over the unpadded W columns.
    """
    _, _, Cin, Cout = weight.shape
    cols = jnp.arange(W)[:, None] + jnp.arange(3)[None, :] - 1     # (W_out, 3)
    cols = jnp.where(cols < 0, -cols, cols)                        # -1 -> 1
    cols = jnp.where(cols > W - 1, 2 * (W - 1) - cols, cols)       # W  -> W-2
    onehot = (cols[:, :, None] == jnp.arange(W)[None, None, :])    # (W_out, 3, W_in)
    band = jnp.einsum("wdu,ydco->yucwo",
                      onehot.astype(weight.dtype), weight)         # (3, W_in, Cin, W_out, Cout)
    band = band.reshape(3, W * Cin, W * Cout)
    return band[0], band[1], band[2]


def _pick_block_n(N, H, *, target_rows=256, min_steps=2):
    """Largest Nb dividing N with Nb*H <= target_rows, while keeping at least
    `min_steps` grid steps when N allows it (v7x has 2 TensorCores; a single
    or odd-length grid leaves one idle)."""
    nb = max(1, min(N, max(1, target_rows // max(H, 1))))
    if N >= min_steps:
        nb = min(nb, max(1, N // min_steps))
    while N % nb:
        nb -= 1
    return max(nb, 1)


def refle_conv_relu(x_nhwc, weight, bias, *, last=False, block_n=None):
    """ReflectionPad2d(1) + Conv2d(3x3, stride=1) + ReLU/Tanh.

    Args:
      x_nhwc: (N, H, W, Cin) float32
      weight: (3, 3, Cin, Cout) float32 (HWIO)
      bias:   (Cout,) float32
      last:   static flag; False -> ReLU, True -> Tanh
    Returns:
      (N, H, W, Cout) float32
    """
    N, H, W, Cin = x_nhwc.shape
    kh, kw, wcin, Cout = weight.shape
    assert (kh, kw) == (3, 3) and wcin == Cin
    assert H >= 2 and W >= 2, "ReflectionPad2d(1) requires H >= 2 and W >= 2"

    Nb = _pick_block_n(N, H) if block_n is None else block_n
    assert N % Nb == 0

    # Free (contiguous) reshape to a lane-dense 3-D view; no padded HBM copy.
    x2d = x_nhwc.reshape(N, H, W * Cin)
    w0, w1, w2 = _band_weights(weight, W)               # each (W*Cin, W*Cout)
    b_tiled = jnp.tile(bias, W).reshape(1, W * Cout)

    # NOTE: for HBM-bound deployments, cast x2d / w0..w2 to bf16 here (keep
    # the f32 accumulate + epilogue in the kernel); kept f32 for the 1e-4
    # self-check below.
    # TODO(synk): for large W, band over a width tile Wt (Wt*Cout ~ 128-512
    # lanes) so the O(W^2*Cin*Cout) weight stays inside v7x's 64 MiB VMEM, and
    # consider pipeline_mode=pl.Buffered(3) on the x BlockSpec at realistic N.

    kernel = functools.partial(_refle_conv_act_kernel, Nb=Nb, H=H, last=last)

    out = pl.pallas_call(
        kernel,
        out_shape=jax.ShapeDtypeStruct((N, H, W * Cout), x_nhwc.dtype),
        grid=(N // Nb,),
        in_specs=[
            pl.BlockSpec((Nb, H, W * Cin), lambda n: (n, 0, 0)),
            pl.BlockSpec((W * Cin, W * Cout), lambda n: (0, 0)),
            pl.BlockSpec((W * Cin, W * Cout), lambda n: (0, 0)),
            pl.BlockSpec((W * Cin, W * Cout), lambda n: (0, 0)),
            pl.BlockSpec((1, W * Cout), lambda n: (0, 0)),
        ],
        out_specs=pl.BlockSpec((Nb, H, W * Cout), lambda n: (n, 0, 0)),
        compiler_params=pltpu.CompilerParams(
            dimension_semantics=("parallel",),
        ),
    )(x2d, w0, w1, w2, b_tiled)

    return out.reshape(N, H, W, Cout)


def _reference(x_nhwc, weight, bias, *, last=False):
    # Pure-JAX reference for verification.
    x_pad = jnp.pad(x_nhwc, ((0, 0), (1, 1), (1, 1), (0, 0)), mode="reflect")
    out = jax.lax.conv_general_dilated(
        x_pad, weight,
        window_strides=(1, 1), padding="VALID",
        dimension_numbers=("NHWC", "HWIO", "NHWC"),
    ) + bias[None, None, None, :]
    return jnp.tanh(out) if last else jnp.maximum(out, 0.0)


if __name__ == "__main__":
    key = jax.random.PRNGKey(0)
    k_x, k_w, k_b = jax.random.split(key, 3)

    N, Cin, Cout, H, W = 2, 4, 8, 16, 16

    # Deterministic parameter init (PyTorch-style uniform(-bound, bound)).
    fan_in = Cin * 3 * 3
    bound = 1.0 / (fan_in ** 0.5)
    weight = jax.random.uniform(
        k_w, (3, 3, Cin, Cout), jnp.float32, -bound, bound)
    bias = jax.random.uniform(k_b, (Cout,), jnp.float32, -bound, bound)

    # Input in NHWC (equivalent NCHW shape would be (2, 4, 16, 16)).
    x = jax.random.normal(k_x, (N, H, W, Cin), jnp.float32)

    out = jax.block_until_ready(refle_conv_relu(x, weight, bias, last=False))
    ref = _reference(x, weight, bias, last=False)
    assert out.shape == (N, H, W, Cout)
    assert jnp.allclose(out, ref, atol=1e-4, rtol=1e-4), float(
        jnp.max(jnp.abs(out - ref)))

    # Also exercise the last=True (tanh) branch.
    out_t = jax.block_until_ready(refle_conv_relu(x, weight, bias, last=True))
    ref_t = _reference(x, weight, bias, last=True)
    assert jnp.allclose(out_t, ref_t, atol=1e-4, rtol=1e-4), float(
        jnp.max(jnp.abs(out_t - ref_t)))

    print("KERNEL_OK")
</pallas_src>

<mosaic_0001>
module attributes {stable_mosaic.version = 11 : i64} {
  func.func @_refle_conv_act_kernel(%arg0: i32, %arg1: memref<1x16x64xf32, #tpu.memory_space<vmem>>, %arg2: memref<64x128xf32, #tpu.memory_space<vmem>>, %arg3: memref<64x128xf32, #tpu.memory_space<vmem>>, %arg4: memref<64x128xf32, #tpu.memory_space<vmem>>, %arg5: memref<1x128xf32, #tpu.memory_space<vmem>>, %arg6: memref<1x16x128xf32, #tpu.memory_space<vmem>>) attributes {dimension_semantics = [#tpu.dimension_semantics<parallel>], iteration_bounds = array<i64: 2>, scalar_prefetch = 0 : i64, scratch_operands = 0 : i64, tpu.core_type = #tpu.core_type<tc>, window_params = [{transform_indices = @transform_0, window_bounds = array<i64: 1, 16, 64>}, {pipeline_mode = #tpu.pipeline_mode<synchronous>, transform_indices = @transform_1, window_bounds = array<i64: 64, 128>}, {pipeline_mode = #tpu.pipeline_mode<synchronous>, transform_indices = @transform_2, window_bounds = array<i64: 64, 128>}, {pipeline_mode = #tpu.pipeline_mode<synchronous>, transform_indices = @transform_3, window_bounds = array<i64: 64, 128>}, {pipeline_mode = #tpu.pipeline_mode<synchronous>, transform_indices = @transform_4, window_bounds = array<i64: 1, 128>}, {transform_indices = @transform_5, window_bounds = array<i64: 1, 16, 128>}]} {
    %c0 = arith.constant 0 : index
    %c0_0 = arith.constant 0 : index
    %c0_1 = arith.constant 0 : index
    %0 = vector.load %arg1[%c0, %c0_0, %c0_1] : memref<1x16x64xf32, #tpu.memory_space<vmem>>, vector<1x16x64xf32>
    %1 = vector.shape_cast %0 : vector<1x16x64xf32> to vector<16x64xf32>
    %c0_2 = arith.constant 0 : index
    %c0_3 = arith.constant 0 : index
    %2 = vector.load %arg2[%c0_2, %c0_3] : memref<64x128xf32, #tpu.memory_space<vmem>>, vector<64x128xf32>
    %cst = arith.constant dense<0.000000e+00> : vector<16x128xf32>
    %3 = tpu.matmul %1, %2, %cst {dimension_numbers = #tpu.dot_dimension_numbers<[1], [0], [0], [1], [0, 0, 1, 1], [], []>} : vector<16x64xf32>, vector<64x128xf32>, vector<16x128xf32> -> vector<16x128xf32>
    %c0_4 = arith.constant 0 : index
    %c0_5 = arith.constant 0 : index
    %4 = vector.load %arg3[%c0_4, %c0_5] : memref<64x128xf32, #tpu.memory_space<vmem>>, vector<64x128xf32>
    %cst_6 = arith.constant dense<0.000000e+00> : vector<16x128xf32>
    %5 = tpu.matmul %1, %4, %cst_6 {dimension_numbers = #tpu.dot_dimension_numbers<[1], [0], [0], [1], [0, 0, 1, 1], [], []>} : vector<16x64xf32>, vector<64x128xf32>, vector<16x128xf32> -> vector<16x128xf32>
    %c0_7 = arith.constant 0 : index
    %c0_8 = arith.constant 0 : index
    %6 = vector.load %arg4[%c0_7, %c0_8] : memref<64x128xf32, #tpu.memory_space<vmem>>, vector<64x128xf32>
    %cst_9 = arith.constant dense<0.000000e+00> : vector<16x128xf32>
    %7 = tpu.matmul %1, %6, %cst_9 {dimension_numbers = #tpu.dot_dimension_numbers<[1], [0], [0], [1], [0, 0, 1, 1], [], []>} : vector<16x64xf32>, vector<64x128xf32>, vector<16x128xf32> -> vector<16x128xf32>
    %8 = tpu.iota {dimensions = array<i32: 0>} : vector<16x1xi32>
    %c16_i32 = arith.constant 16 : i32
    %c0_i32 = arith.constant 0 : i32
    %9 = arith.cmpi eq, %c16_i32, %c0_i32 : i32
    %c1_i32 = arith.constant 1 : i32
    %10 = arith.select %9, %c1_i32, %c16_i32 : i32
    %11 = vector.broadcast %10 : i32 to vector<16x1xi32>
    %12 = arith.remsi %8, %11 : vector<16x1xi32>
    %c0_i32_10 = arith.constant 0 : i32
    %13 = vector.broadcast %c0_i32_10 : i32 to vector<16x1xi32>
    %14 = arith.cmpi ne, %12, %13 : vector<16x1xi32>
    %c0_i32_11 = arith.constant 0 : i32
    %15 = vector.broadcast %c0_i32_11 : i32 to vector<16x1xi32>
    %16 = arith.cmpi slt, %12, %15 : vector<16x1xi32>
    %c0_i32_12 = arith.constant 0 : i32
    %17 = arith.cmpi slt, %10, %c0_i32_12 : i32
    %18 = vector.broadcast %17 : i1 to vector<16x1xi1>
    %19 = vector.broadcast %18 : vector<16x1xi1> to vector<16x1xi1>
    %20 = arith.xori %16, %19 : vector<16x1xi1>
    %21 = arith.andi %20, %14 : vector<16x1xi1>
    %22 = vector.broadcast %10 : i32 to vector<16x1xi32>
    %23 = arith.addi %12, %22 : vector<16x1xi32>
    %24 = arith.select %21, %23, %12 : vector<16x1xi1>, vector<16x1xi32>
    %c0_i32_13 = arith.constant 0 : i32
    %25 = vector.broadcast %c0_i32_13 : i32 to vector<16x1xi32>
    %26 = arith.cmpi eq, %24, %25 : vector<16x1xi32>
    %c15_i32 = arith.constant 15 : i32
    %27 = vector.broadcast %c15_i32 : i32 to vector<16x1xi32>
    %28 = arith.cmpi eq, %24, %27 : vector<16x1xi32>
    %c1_i32_14 = arith.constant 1 : i32
    %29 = tpu.dynamic_rotate %3 by %c1_i32_14 dim 0 : vector<16x128xf32>, i32 -> vector<16x128xf32>
    %c15_i32_15 = arith.constant 15 : i32
    %30 = tpu.dynamic_rotate %3 by %c15_i32_15 dim 0 : vector<16x128xf32>, i32 -> vector<16x128xf32>
    %c15_i32_16 = arith.constant 15 : i32
    %31 = tpu.dynamic_rotate %7 by %c15_i32_16 dim 0 : vector<16x128xf32>, i32 -> vector<16x128xf32>
    %c1_i32_17 = arith.constant 1 : i32
    %32 = tpu.dynamic_rotate %7 by %c1_i32_17 dim 0 : vector<16x128xf32>, i32 -> vector<16x128xf32>
    %33 = vector.shape_cast %26 : vector<16x1xi1> to vector<16x1xi1>
    %34 = vector.broadcast %33 : vector<16x1xi1> to vector<16x128xi1>
    %35 = arith.select %34, %30, %29 : vector<16x128xi1>, vector<16x128xf32>
    %36 = vector.shape_cast %28 : vector<16x1xi1> to vector<16x1xi1>
    %37 = vector.broadcast %36 : vector<16x1xi1> to vector<16x128xi1>
    %38 = arith.select %37, %32, %31 : vector<16x128xi1>, vector<16x128xf32>
    %39 = arith.addf %35, %5 : vector<16x128xf32>
    %40 = arith.addf %39, %38 : vector<16x128xf32>
    %c0_18 = arith.constant 0 : index
    %c0_19 = arith.constant 0 : index
    %41 = vector.load %arg5[%c0_18, %c0_19] : memref<1x128xf32, #tpu.memory_space<vmem>>, vector<1x128xf32>
    %42 = vector.broadcast %41 : vector<1x128xf32> to vector<16x128xf32>
    %43 = arith.addf %40, %42 : vector<16x128xf32>
    %cst_20 = arith.constant 0.000000e+00 : f32
    %44 = vector.broadcast %cst_20 : f32 to vector<16x128xf32>
    %45 = arith.maximumf %43, %44 : vector<16x128xf32>
    %46 = vector.shape_cast %45 : vector<16x128xf32> to vector<1x16x128xf32>
    %c0_21 = arith.constant 0 : index
    %c0_22 = arith.constant 0 : index
    %c0_23 = arith.constant 0 : index
    %47 = vector.load %arg6[%c0_21, %c0_22, %c0_23] : memref<1x16x128xf32, #tpu.memory_space<vmem>>, vector<1x16x128xf32>
    tpu.vector_store %arg6[%c0_21, %c0_22, %c0_23], %46 {strides = array<i32>} : memref<1x16x128xf32, #tpu.memory_space<vmem>>, vector<1x16x128xf32>,
    return
  }
  func.func @transform_0(%arg0: i32) -> (i32, i32, i32) {
    %c0_i32 = arith.constant 0 : i32
    %c0_i32_0 = arith.constant 0 : i32
    %c0_i32_1 = arith.constant 0 : i32
    return %arg0, %c0_i32, %c0_i32_0 : i32, i32, i32
  }
  func.func @transform_1(%arg0: i32) -> (i32, i32) {
    %c0_i32 = arith.constant 0 : i32
    %c0_i32_0 = arith.constant 0 : i32
    %c0_i32_1 = arith.constant 0 : i32
    return %c0_i32, %c0_i32_0 : i32, i32
  }
  func.func @transform_2(%arg0: i32) -> (i32, i32) {
    %c0_i32 = arith.constant 0 : i32
    %c0_i32_0 = arith.constant 0 : i32
    %c0_i32_1 = arith.constant 0 : i32
    return %c0_i32, %c0_i32_0 : i32, i32
  }
  func.func @transform_3(%arg0: i32) -> (i32, i32) {
    %c0_i32 = arith.constant 0 : i32
    %c0_i32_0 = arith.constant 0 : i32
    %c0_i32_1 = arith.constant 0 : i32
    return %c0_i32, %c0_i32_0 : i32, i32
  }
  func.func @transform_4(%arg0: i32) -> (i32, i32) {
    %c0_i32 = arith.constant 0 : i32
    %c0_i32_0 = arith.constant 0 : i32
    %c0_i32_1 = arith.constant 0 : i32
    return %c0_i32, %c0_i32_0 : i32, i32
  }
  func.func @transform_5(%arg0: i32) -> (i32, i32, i32) {
    %c0_i32 = arith.constant 0 : i32
    %c0_i32_0 = arith.constant 0 : i32
    %c0_i32_1 = arith.constant 0 : i32
    return %arg0, %c0_i32, %c0_i32_0 : i32, i32, i32
  }
}

</mosaic_0001>

<llo_original>
// kernel: tpu_custom_call.1
$region0: #{tpu_custom_call.1}
  #allocation0 [shape = 'u32[]', space=smem, size = 0x4, offset = 0x4, fixed_abs, tag = 'smem constant byte address 0x4 - core index']
  #allocation1 [shape = 'u32[144,128]{1,0:T(1,128)}', space=vmem, size = 0x12000, scoped, tag = 'internal scratch']
  %s0 = inlined_call_operand.hbm [shape: f32[2,16,64], index: 0, kind: input, shape index: {}]
  %s1 = inlined_call_operand.hbm [shape: f32[64,128], index: 1, kind: input, shape index: {}]
  %s2 = inlined_call_operand.hbm [shape: f32[64,128], index: 2, kind: input, shape index: {}]
  %s3 = inlined_call_operand.hbm [shape: f32[64,128], index: 3, kind: input, shape index: {}]
  %s4 = inlined_call_operand.vmem [shape: f32[1,128], index: 4, kind: input, shape index: {}]
  %s5 = inlined_call_operand.hbm [shape: f32[2,16,128], index: 5, kind: output, shape index: {}]
  %s6 = sld [smem:[#allocation0]]
  $region69: #{tpu_custom_call.1} parent=0
    _
  %s8 = ssub.s32 1, %s6
  %s9 = scalar_select 0, %s8, %s6
  $region1: #{tpu_custom_call.1} parent=0
    #allocation2 [shape = 'u8[16384]{0}', space=vmem, size = 0x4000, scoped, tag = 'input window, operand 0']
    #allocation3 [shape = 's32[2]{0}', space=sflag, size = 0x8, scoped, tag = 'scoped memory for tpu_custom_call.1']
    #allocation4 [shape = 's32[2]{0}', space=sflag, size = 0x8, scoped, tag = 'scoped memory for tpu_custom_call.1']
    #allocation5 [shape = 'u8[32768]{0}', space=vmem, size = 0x8000, scoped, tag = 'input window, operand 1, single buffered']
    #allocation6 [shape = 's32[1]{0}', space=sflag, size = 0x4, scoped, tag = 'scoped memory for tpu_custom_call.1']
    #allocation7 [shape = 'u8[32768]{0}', space=vmem, size = 0x8000, scoped, tag = 'input window, operand 2, single buffered']
    #allocation8 [shape = 'u8[32768]{0}', space=vmem, size = 0x8000, scoped, tag = 'input window, operand 3, single buffered']
    #allocation9 [shape = 's32[1]{0}', space=sflag, size = 0x4, scoped, tag = 'scoped memory for tpu_custom_call.1']
    #allocation10 [shape = 'u8[16384]{0}', space=vmem, size = 0x4000, scoped, tag = 'output window, operand 0']
    %10 = vsyncpa [#allocation3], 0
    %s11 = scalar_lea.sflag [#allocation3], 1
    %12 = vsyncpa %s11, 0
    %13 = vsyncpa [#allocation6], 0
    %14 = vsyncpa [#allocation9], 0
    %15 = vsyncpa [#allocation4], 0
    %s16 = scalar_lea.sflag [#allocation4], 1
    %17 = vsyncpa %s16, 0
    loop: start=0, step=1, limit=4
    $region2: #{tpu_custom_call.1} parent=1 // loop_pre_header
      _
    $region3: #{tpu_custom_call.1} parent=1 // loop_header
      %s19 = sphi 0, %s23
      %p20 = scmp.ge.s32.totalorder %s19, 4
      %s29 = sphi 0, %s31
      %s32 = sphi 0, %s29
      %s33 = sphi 0, %s32
      %s49 = sphi 0, %s33
      %s53 = sphi 0, %s53
      %s55 = sphi 0, %s53
      %s56 = sphi 0, %s55
      %s70 = sphi 0, %s56
      %s74 = sphi 0, %s74
      %s76 = sphi 0, %s74
      %s77 = sphi 0, %s76
      %s91 = sphi 0, %s77
      %s95 = sphi 0, %s95
      %s97 = sphi 0, %s95
      %s98 = sphi 0, %s97
      %s112 = sphi 0, %s98
      %s116 = sphi 0, %s116
      %s118 = sphi 0, %s116
      %s119 = sphi 0, %s118
      %s133 = sphi 0, %s119
      %s139 = sphi 0, %s141
      %s142 = sphi 0, %s139
      %s143 = sphi 0, %s142
      %s159 = sphi 0, %s143
    $region4: #{tpu_custom_call.1} parent=1 // loop_header_branch
      %22 = sbr.rel (%p20) target = $region8
    $region5: #{tpu_custom_call.1} parent=1 // loop_body
      %s24 = ssub.s32 %s19, 1
      %s25 = ssub.s32 %s19, 2
      %s26 = sadd.s32 %s19, 1
      %s27 = ssub.s32 %s19, %s26
      %p28 = scmp.eq.s32.totalorder %s27, 0
      %s30 = sadd.s32 %s29, 1
      %s31 = scalar_select %p28, %s29, %s30
      %p34 = pneg %p28
      %p35 = scmp.eq.s32.totalorder %s19, 1
      %p36 = por %p34, %p35
      %p37 = scmp.ne.s32.totalorder %s29, %s32
      %p38 = scmp.eq.s32.totalorder %s19, 0
      %p39 = por %p37, %p38
      %p40 = scmp.ne.s32.totalorder %s29, %s32
      %p41 = scmp.eq.s32.totalorder %s24, 1
      %p42 = por %p40, %p41
      %p43 = scmp.ne.s32.totalorder %s32, %s33
      %p44 = scmp.eq.s32.totalorder %s24, 0
      %p45 = por %p43, %p44
      %p46 = scmp.ne.s32.totalorder %s32, %s33
      %p47 = scmp.eq.s32.totalorder %s25, 1
      %p48 = por %p46, %p47
      %p50 = scmp.ne.s32.totalorder %s33, %s49
      %p51 = scmp.eq.s32.totalorder %s25, 0
      %p52 = por %p50, %p51
      %s54 = sadd.s32 %s53, 1
      %p57 = scmp.eq.s32.totalorder %s19, 1
      %p58 = scmp.ne.s32.totalorder %s53, %s55
      %p59 = scmp.eq.s32.totalorder %s19, 0
      %p60 = por %p58, %p59
      %p61 = scmp.ne.s32.totalorder %s53, %s55
      %p62 = scmp.eq.s32.totalorder %s24, 1
      %p63 = por %p61, %p62
      %p64 = scmp.ne.s32.totalorder %s55, %s56
      %p65 = scmp.eq.s32.totalorder %s24, 0
      %p66 = por %p64, %p65
      %p67 = scmp.ne.s32.totalorder %s55, %s56
      %p68 = scmp.eq.s32.totalorder %s25, 1
      %p69 = por %p67, %p68
      %p71 = scmp.ne.s32.totalorder %s56, %s70
      %p72 = scmp.eq.s32.totalorder %s25, 0
      %p73 = por %p71, %p72
      %s75 = sadd.s32 %s74, 1
      %p78 = scmp.eq.s32.totalorder %s19, 1
      %p79 = scmp.ne.s32.totalorder %s74, %s76
      %p80 = scmp.eq.s32.totalorder %s19, 0
      %p81 = por %p79, %p80
      %p82 = scmp.ne.s32.totalorder %s74, %s76
      %p83 = scmp.eq.s32.totalorder %s24, 1
      %p84 = por %p82, %p83
      %p85 = scmp.ne.s32.totalorder %s76, %s77
      %p86 = scmp.eq.s32.totalorder %s24, 0
      %p87 = por %p85, %p86
      %p88 = scmp.ne.s32.totalorder %s76, %s77
      %p89 = scmp.eq.s32.totalorder %s25, 1
      %p90 = por %p88, %p89
      %p92 = scmp.ne.s32.totalorder %s77, %s91
      %p93 = scmp.eq.s32.totalorder %s25, 0
      %p94 = por %p92, %p93
      %s96 = sadd.s32 %s95, 1
      %p99 = scmp.eq.s32.totalorder %s19, 1
      %p100 = scmp.ne.s32.totalorder %s95, %s97
      %p101 = scmp.eq.s32.totalorder %s19, 0
      %p102 = por %p100, %p101
      %p103 = scmp.ne.s32.totalorder %s95, %s97
      %p104 = scmp.eq.s32.totalorder %s24, 1
      %p105 = por %p103, %p104
      %p106 = scmp.ne.s32.totalorder %s97, %s98
      %p107 = scmp.eq.s32.totalorder %s24, 0
      %p108 = por %p106, %p107
      %p109 = scmp.ne.s32.totalorder %s97, %s98
      %p110 = scmp.eq.s32.totalorder %s25, 1
      %p111 = por %p109, %p110
      %p113 = scmp.ne.s32.totalorder %s98, %s112
      %p114 = scmp.eq.s32.totalorder %s25, 0
      %p115 = por %p113, %p114
      %s117 = sadd.s32 %s116, 1
      %p120 = scmp.eq.s32.totalorder %s19, 1
      %p121 = scmp.ne.s32.totalorder %s116, %s118
      %p122 = scmp.eq.s32.totalorder %s19, 0
      %p123 = por %p121, %p122
      %p124 = scmp.ne.s32.totalorder %s116, %s118
      %p125 = scmp.eq.s32.totalorder %s24, 1
      %p126 = por %p124, %p125
      %p127 = scmp.ne.s32.totalorder %s118, %s119
      %p128 = scmp.eq.s32.totalorder %s24, 0
      %p129 = por %p127, %p128
      %p130 = scmp.ne.s32.totalorder %s118, %s119
      %p131 = scmp.eq.s32.totalorder %s25, 1
      %p132 = por %p130, %p131
      %p134 = scmp.ne.s32.totalorder %s119, %s133
      %p135 = scmp.eq.s32.totalorder %s25, 0
      %p136 = por %p134, %p135
      %s137 = ssub.s32 %s19, %s26
      %p138 = scmp.eq.s32.totalorder %s137, 0
      %s140 = sadd.s32 %s139, 1
      %s141 = scalar_select %p138, %s139, %s140
      %p144 = pneg %p138
      %p145 = scmp.eq.s32.totalorder %s19, 1
      %p146 = por %p144, %p145
      %p147 = scmp.ne.s32.totalorder %s139, %s142
      %p148 = scmp.eq.s32.totalorder %s19, 0
      %p149 = por %p147, %p148
      %p150 = scmp.ne.s32.totalorder %s139, %s142
      %p151 = scmp.eq.s32.totalorder %s24, 1
      %p152 = por %p150, %p151
      %p153 = scmp.ne.s32.totalorder %s142, %s143
      %p154 = scmp.eq.s32.totalorder %s24, 0
      %p155 = por %p153, %p154
      %p156 = scmp.ne.s32.totalorder %s142, %s143
      %p157 = scmp.eq.s32.totalorder %s25, 1
      %p158 = por %p156, %p157
      %p160 = scmp.ne.s32.totalorder %s143, %s159
      %p161 = scmp.eq.s32.totalorder %s25, 0
      %p162 = por %p160, %p161
      %p163 = scmp.le.s32.totalorder 1, %s19
      %p164 = scmp.lt.s32.totalorder %s19, 3
      %p165 = pnand %p163, %p164
      %p166 = pneg %p165
      // Predicated region
      $region9: #{tpu_custom_call.1} parent=5 // pred_check
        _
      $region10: #{tpu_custom_call.1} parent=5 // pred_check_branch
        %168 = sbr.rel (%p165) target = $region12
      $region11: #{tpu_custom_call.1} parent=5 // pred_region
        %s169 = ssub.s32 %s19, 1
        // Predicated region
        $region13: #{tpu_custom_call.1} parent=11 // pred_check
          %p170 = pneg %p66
        $region14: #{tpu_custom_call.1} parent=11 // pred_check_branch
          %172 = sbr.rel (%p170) target = $region16
        $region15: #{tpu_custom_call.1} parent=11 // pred_region
          %s174 = ssub.s32 1024, 1024
          %175 = vsyncadd [#allocation6], %s174
          %s176 = sshll.u32 [#allocation5], 4
          %s177 = int_to_ptr.vmem [resolvable:$true] %s176
          %182 = dma.hbm_to_vmem [thread:$0]  %s1, 1024, %s177, [#allocation6], 128, 128, 8
        $region16: #{tpu_custom_call.1} parent=11 // pred_fallthru
          _
        // Predicated region
        $region17: #{tpu_custom_call.1} parent=11 // pred_check
          %p183 = pneg %p87
        $region18: #{tpu_custom_call.1} parent=11 // pred_check_branch
          %185 = sbr.rel (%p183) target = $region20
        $region19: #{tpu_custom_call.1} parent=11 // pred_region
          %s187 = ssub.s32 1024, 1024
          %188 = vsyncadd [#allocation6], %s187
          %s189 = sshll.u32 [#allocation7], 4
          %s190 = int_to_ptr.vmem [resolvable:$true] %s189
          %195 = dma.hbm_to_vmem [thread:$0]  %s2, 1024, %s190, [#allocation6], 128, 128, 8
        $region20: #{tpu_custom_call.1} parent=11 // pred_fallthru
          _
        // Predicated region
        $region21: #{tpu_custom_call.1} parent=11 // pred_check
          %p196 = pneg %p108
        $region22: #{tpu_custom_call.1} parent=11 // pred_check_branch
          %198 = sbr.rel (%p196) target = $region24
        $region23: #{tpu_custom_call.1} parent=11 // pred_region
          %s200 = ssub.s32 1024, 1024
          %201 = vsyncadd [#allocation9], %s200
          %s202 = sshll.u32 [#allocation8], 4
          %s203 = int_to_ptr.vmem [resolvable:$true] %s202
          %208 = dma.hbm_to_vmem [thread:$0]  %s3, 1024, %s203, [#allocation9], 128, 128, 8
        $region24: #{tpu_custom_call.1} parent=11 // pred_fallthru
          _
        // Predicated region
        $region25: #{tpu_custom_call.1} parent=11 // pred_check
          %p209 = pneg %p129
        $region26: #{tpu_custom_call.1} parent=11 // pred_check_branch
          %211 = sbr.rel (%p209) target = $region28
        $region27: #{tpu_custom_call.1} parent=11 // pred_region
          _
        $region28: #{tpu_custom_call.1} parent=11 // pred_fallthru
          _
      $region12: #{tpu_custom_call.1} parent=5 // pred_fallthru
        _
      %p212 = scmp.lt.s32.totalorder %s19, 2
      // Predicated region
      $region29: #{tpu_custom_call.1} parent=5 // pred_check
        %p213 = pneg %p212
      $region30: #{tpu_custom_call.1} parent=5 // pred_check_branch
        %215 = sbr.rel (%p213) target = $region32
      $region31: #{tpu_custom_call.1} parent=5 // pred_region
        // Predicated region
        $region33: #{tpu_custom_call.1} parent=31 // pred_check
          %p216 = pneg %p39
        $region34: #{tpu_custom_call.1} parent=31 // pred_check_branch
          %218 = sbr.rel (%p216) target = $region36
        $region35: #{tpu_custom_call.1} parent=31 // pred_region
          %s219 = sand.u32 %s29, 1
          %s220 = scalar_lea.sflag [#allocation3], %s219
          %s221 = sand.u32 %s29, 1
          %s222 = smul.addr %s221, 16
          %s223 = scalar_lea.vmem [#allocation2], %s222
          %s225 = ssub.s32 256, 256
          %226 = vsyncadd %s220, %s225
          %s227 = smul.addr %s19, 2
          %s228 = smul.addr %s227, 128
          %s229 = scalar_lea.hbm %s0, %s228
          %s230 = sshll.u32 %s223, 4
          %s231 = int_to_ptr.vmem [resolvable:$true] %s230
          %236 = dma.hbm_to_vmem [thread:$0]  %s229, 256, %s231, %s220, 128, 128, 8
        $region36: #{tpu_custom_call.1} parent=31 // pred_fallthru
          _
      $region32: #{tpu_custom_call.1} parent=5 // pred_fallthru
        _
      %p237 = scmp.le.s32.totalorder 1, %s19
      %p238 = scmp.lt.s32.totalorder %s19, 3
      %p239 = pnand %p237, %p238
      %p240 = pneg %p239
      // Predicated region
      $region37: #{tpu_custom_call.1} parent=5 // pred_check
        _
      $region38: #{tpu_custom_call.1} parent=5 // pred_check_branch
        %242 = sbr.rel (%p239) target = $region40
      $region39: #{tpu_custom_call.1} parent=5 // pred_region
        %s243 = ssub.s32 %s19, 1
        %s244 = sand.u32 %s32, 1
        %s245 = scalar_lea.sflag [#allocation3], %s244
        %s246 = sand.u32 %s32, 1
        %s247 = smul.addr %s246, 16
        %s248 = scalar_lea.vmem [#allocation2], %s247
        // Predicated region
        $region41: #{tpu_custom_call.1} parent=39 // pred_check
          %p249 = pneg %p45
        $region42: #{tpu_custom_call.1} parent=39 // pred_check_branch
          %251 = sbr.rel (%p249) target = $region44
        $region43: #{tpu_custom_call.1} parent=39 // pred_region
          %252 = dma.done %s245, 256
        $region44: #{tpu_custom_call.1} parent=39 // pred_fallthru
          _
        // Predicated region
        $region45: #{tpu_custom_call.1} parent=39 // pred_check
          %p253 = pneg %p66
        $region46: #{tpu_custom_call.1} parent=39 // pred_check_branch
          %255 = sbr.rel (%p253) target = $region48
        $region47: #{tpu_custom_call.1} parent=39 // pred_region
          %256 = dma.done [#allocation6], 1024
        $region48: #{tpu_custom_call.1} parent=39 // pred_fallthru
          _
        // Predicated region
        $region49: #{tpu_custom_call.1} parent=39 // pred_check
          %p257 = pneg %p87
        $region50: #{tpu_custom_call.1} parent=39 // pred_check_branch
          %259 = sbr.rel (%p257) target = $region52
        $region51: #{tpu_custom_call.1} parent=39 // pred_region
          %260 = dma.done [#allocation6], 1024
        $region52: #{tpu_custom_call.1} parent=39 // pred_fallthru
          _
        // Predicated region
        $region53: #{tpu_custom_call.1} parent=39 // pred_check
          %p261 = pneg %p108
        $region54: #{tpu_custom_call.1} parent=39 // pred_check_branch
          %263 = sbr.rel (%p261) target = $region56
        $region55: #{tpu_custom_call.1} parent=39 // pred_region
          %264 = dma.done [#allocation9], 1024
        $region56: #{tpu_custom_call.1} parent=39 // pred_fallthru
          _
        %s265 = sand.u32 %s32, 1
        %s266 = scalar_lea.sflag [#allocation3], %s265
        %s267 = sand.u32 %s32, 1
        %s268 = smul.addr %s267, 16
        %s269 = scalar_lea.vmem [#allocation2], %s268
        %p270 = pneg %p45
        %p271 = pneg %p42
        %p272 = pneg %p66
        %p273 = pneg %p63
        %p274 = pneg %p87
        %p275 = pneg %p84
        %p276 = pneg %p108
        %p277 = pneg %p105
        %p278 = pneg %p129
        %p279 = pneg %p126
        %p280 = pneg %p155
        %p281 = pneg %p152
        %s282 = sand.u32 %s142, 1
        %s283 = scalar_lea.sflag [#allocation4], %s282
        %s284 = sand.u32 %s142, 1
        %s285 = smul.addr %s284, 16
        %s286 = scalar_lea.vmem [#allocation10], %s285
        %v287 = vld [vmem:[%s248] sm:$0xff]
        %v288 = vld [vmem:[%s248 + $0x8] sm:$0xff]
        %v289 = vld [vmem:[#allocation5] sm:$0xff]
        %v290 = vld [vmem:[#allocation5 + $0x8] sm:$0xff]
        %v291 = vld [vmem:[#allocation5 + $0x10] sm:$0xff]
        %v292 = vld [vmem:[#allocation5 + $0x18] sm:$0xff]
        %v293 = vld [vmem:[#allocation5 + $0x20] sm:$0xff]
        %v294 = vld [vmem:[#allocation5 + $0x28] sm:$0xff]
        %v295 = vld [vmem:[#allocation5 + $0x30] sm:$0xff]
        %v296 = vld [vmem:[#allocation5 + $0x38] sm:$0xff]
        %vm297 = vcmask 523264
        %v299 = vsel %vm297, %v287, 0
        %v302 = vsel %vm297, %v288, 0
        %304 = vmatprep.subr.mxu0 0.0
        %305 = vmatpush1.msra.mxu0 0.0
        %306 = vmatprep.subr.mxu0 0.0
        %307 = vmatpush1.msra.mxu0 0.0
        %308 = vmatprep.subr.mxu0 0.0
        %309 = vmatpush1.msra.mxu0 0.0
        %310 = vmatprep.subr.mxu0 0.0
        %311 = vmatpush1.msra.mxu0 0.0
        %312 = vmatprep.subr.mxu0 0.0
        %313 = vmatpush1.msra.mxu0 0.0
        %314 = vmatprep.subr.mxu0 0.0
        %315 = vmatpush1.msra.mxu0 0.0
        %316 = vmatprep.subr.mxu0 0.0
        %317 = vmatpush1.msra.mxu0 0.0
        %318 = vmatprep.subr.mxu0 0.0
        %319 = vmatpush1.msra.mxu0 0.0
        %320 = vmatprep.subr.mxu0 0.0
        %321 = vmatpush1.msra.mxu0 %v296
        %322 = vmatprep.subr.mxu0 0.0
        %323 = vmatpush1.msra.mxu0 %v295
        %324 = vmatprep.subr.mxu0 0.0
        %325 = vmatpush1.msra.mxu0 %v294
        %326 = vmatprep.subr.mxu0 0.0
        %327 = vmatpush1.msra.mxu0 %v293
        %328 = vmatprep.subr.mxu0 0.0
        %329 = vmatpush1.msra.mxu0 %v292
        %330 = vmatprep.subr.mxu0 0.0
        %331 = vmatpush1.msra.mxu0 %v291
        %332 = vmatprep.subr.mxu0 0.0
        %333 = vmatpush1.msra.mxu0 %v290
        %334 = vmatprep.subr.mxu0 0.0
        %335 = vmatpush1.msra.mxu0 %v289
        %336 = vmatprep.subr.mxu0 0.0
        %337 = vmatpush2.msra.mxu0 0.0
        %338 = vmatprep.subr.mxu0 0.0
        %339 = vmatpush2.msra.mxu0 0.0
        %340 = vmatprep.subr.mxu0 0.0
        %341 = vmatpush2.msra.mxu0 0.0
        %342 = vmatprep.subr.mxu0 0.0
        %343 = vmatpush2.msra.mxu0 0.0
        %344 = vmatprep.subr.mxu0 0.0
        %345 = vmatpush2.msra.mxu0 0.0
        %346 = vmatprep.subr.mxu0 0.0
        %347 = vmatpush2.msra.mxu0 0.0
        %348 = vmatprep.subr.mxu0 0.0
        %349 = vmatpush2.msra.mxu0 0.0
        %350 = vmatprep.subr.mxu0 0.0
        %351 = vmatpush2.msra.mxu0 0.0
        %352 = vmatprep.subr.mxu0 0.0
        %353 = vmatpush2.msra.mxu0 0.0
        %354 = vmatprep.subr.mxu0 0.0
        %355 = vmatpush2.msra.mxu0 0.0
        %356 = vmatprep.subr.mxu0 0.0
        %357 = vmatpush2.msra.mxu0 0.0
        %358 = vmatprep.subr.mxu0 0.0
        %359 = vmatpush2.msra.mxu0 0.0
        %360 = vmatprep.subr.mxu0 0.0
        %361 = vmatpush2.msra.mxu0 0.0
        %362 = vmatprep.subr.mxu0 0.0
        %363 = vmatpush2.msra.mxu0 0.0
        %364 = vmatprep.subr.mxu0 0.0
        %365 = vmatpush2.msra.mxu0 0.0
        %366 = vmatprep.subr.mxu0 0.0
        %367 = vmatpush2.msra.mxu0 0.0
        %368 = vmatprep.mubr.f32.mxu0 0.0
        %369 = vmatmul.mubr.f32.gmra.mxu0 %v299
        %v370 = vpop.f32.mrf.mxu0
        %v371 = vadd.f32 0.0, %v370
        %v372 = vpop.f32.mrf.mxu0
        %373 = vmatprep.mubr.f32.mxu0 0.0
        %374 = vmatmul.mubr.f32.gmra.mxu0 %v302
        %v375 = vpop.f32.mrf.mxu0
        %v376 = vadd.f32 0.0, %v375
        %v377 = vpop.f32.mrf.mxu0
        %378 = vdwg.mxu0
        %v379 = vld [vmem:[#allocation7] sm:$0xff]
        %v380 = vld [vmem:[#allocation7 + $0x8] sm:$0xff]
        %v381 = vld [vmem:[#allocation7 + $0x10] sm:$0xff]
        %v382 = vld [vmem:[#allocation7 + $0x18] sm:$0xff]
        %v383 = vld [vmem:[#allocation7 + $0x20] sm:$0xff]
        %v384 = vld [vmem:[#allocation7 + $0x28] sm:$0xff]
        %v385 = vld [vmem:[#allocation7 + $0x30] sm:$0xff]
        %v386 = vld [vmem:[#allocation7 + $0x38] sm:$0xff]
        %387 = vmatprep.subr.mxu0 0.0
        %388 = vmatpush1.msra.mxu0 0.0
        %389 = vmatprep.subr.mxu0 0.0
        %390 = vmatpush1.msra.mxu0 0.0
        %391 = vmatprep.subr.mxu0 0.0
        %392 = vmatpush1.msra.mxu0 0.0
        %393 = vmatprep.subr.mxu0 0.0
        %394 = vmatpush1.msra.mxu0 0.0
        %395 = vmatprep.subr.mxu0 0.0
        %396 = vmatpush1.msra.mxu0 0.0
        %397 = vmatprep.subr.mxu0 0.0
        %398 = vmatpush1.msra.mxu0 0.0
        %399 = vmatprep.subr.mxu0 0.0
        %400 = vmatpush1.msra.mxu0 0.0
        %401 = vmatprep.subr.mxu0 0.0
        %402 = vmatpush1.msra.mxu0 0.0
        %403 = vmatprep.subr.mxu0 0.0
        %404 = vmatpush1.msra.mxu0 %v386
        %405 = vmatprep.subr.mxu0 0.0
        %406 = vmatpush1.msra.mxu0 %v385
        %407 = vmatprep.subr.mxu0 0.0
        %408 = vmatpush1.msra.mxu0 %v384
        %409 = vmatprep.subr.mxu0 0.0
        %410 = vmatpush1.msra.mxu0 %v383
        %411 = vmatprep.subr.mxu0 0.0
        %412 = vmatpush1.msra.mxu0 %v382
        %413 = vmatprep.subr.mxu0 0.0
        %414 = vmatpush1.msra.mxu0 %v381
        %415 = vmatprep.subr.mxu0 0.0
        %416 = vmatpush1.msra.mxu0 %v380
        %417 = vmatprep.subr.mxu0 0.0
        %418 = vmatpush1.msra.mxu0 %v379
        %419 = vmatprep.subr.mxu0 0.0
        %420 = vmatpush2.msra.mxu0 0.0
        %421 = vmatprep.subr.mxu0 0.0
        %422 = vmatpush2.msra.mxu0 0.0
        %423 = vmatprep.subr.mxu0 0.0
        %424 = vmatpush2.msra.mxu0 0.0
        %425 = vmatprep.subr.mxu0 0.0
        %426 = vmatpush2.msra.mxu0 0.0
        %427 = vmatprep.subr.mxu0 0.0
        %428 = vmatpush2.msra.mxu0 0.0
        %429 = vmatprep.subr.mxu0 0.0
        %430 = vmatpush2.msra.mxu0 0.0
        %431 = vmatprep.subr.mxu0 0.0
        %432 = vmatpush2.msra.mxu0 0.0
        %433 = vmatprep.subr.mxu0 0.0
        %434 = vmatpush2.msra.mxu0 0.0
        %435 = vmatprep.subr.mxu0 0.0
        %436 = vmatpush2.msra.mxu0 0.0
        %437 = vmatprep.subr.mxu0 0.0
        %438 = vmatpush2.msra.mxu0 0.0
        %439 = vmatprep.subr.mxu0 0.0
        %440 = vmatpush2.msra.mxu0 0.0
        %441 = vmatprep.subr.mxu0 0.0
        %442 = vmatpush2.msra.mxu0 0.0
        %443 = vmatprep.subr.mxu0 0.0
        %444 = vmatpush2.msra.mxu0 0.0
        %445 = vmatprep.subr.mxu0 0.0
        %446 = vmatpush2.msra.mxu0 0.0
        %447 = vmatprep.subr.mxu0 0.0
        %448 = vmatpush2.msra.mxu0 0.0
        %449 = vmatprep.subr.mxu0 0.0
        %450 = vmatpush2.msra.mxu0 0.0
        %451 = vmatprep.mubr.f32.mxu0 0.0
        %452 = vmatmul.mubr.f32.gmra.mxu0 %v299
        %v453 = vpop.f32.mrf.mxu0
        %v454 = vadd.f32 0.0, %v453
        %v455 = vpop.f32.mrf.mxu0
        %456 = vmatprep.mubr.f32.mxu0 0.0
        %457 = vmatmul.mubr.f32.gmra.mxu0 %v302
        %v458 = vpop.f32.mrf.mxu0
        %v459 = vadd.f32 0.0, %v458
        %v460 = vpop.f32.mrf.mxu0
        %461 = vdwg.mxu0
        %v462 = vld [vmem:[#allocation8] sm:$0xff]
        %v463 = vld [vmem:[#allocation8 + $0x8] sm:$0xff]
        %v464 = vld [vmem:[#allocation8 + $0x10] sm:$0xff]
        %v465 = vld [vmem:[#allocation8 + $0x18] sm:$0xff]
        %v466 = vld [vmem:[#allocation8 + $0x20] sm:$0xff]
        %v467 = vld [vmem:[#allocation8 + $0x28] sm:$0xff]
        %v468 = vld [vmem:[#allocation8 + $0x30] sm:$0xff]
        %v469 = vld [vmem:[#allocation8 + $0x38] sm:$0xff]
        %470 = vmatprep.subr.mxu0 0.0
        %471 = vmatpush1.msra.mxu0 0.0
        %472 = vmatprep.subr.mxu0 0.0
        %473 = vmatpush1.msra.mxu0 0.0
        %474 = vmatprep.subr.mxu0 0.0
        %475 = vmatpush1.msra.mxu0 0.0
        %476 = vmatprep.subr.mxu0 0.0
        %477 = vmatpush1.msra.mxu0 0.0
        %478 = vmatprep.subr.mxu0 0.0
        %479 = vmatpush1.msra.mxu0 0.0
        %480 = vmatprep.subr.mxu0 0.0
        %481 = vmatpush1.msra.mxu0 0.0
        %482 = vmatprep.subr.mxu0 0.0
        %483 = vmatpush1.msra.mxu0 0.0
        %484 = vmatprep.subr.mxu0 0.0
        %485 = vmatpush1.msra.mxu0 0.0
        %486 = vmatprep.subr.mxu0 0.0
        %487 = vmatpush1.msra.mxu0 %v469
        %488 = vmatprep.subr.mxu0 0.0
        %489 = vmatpush1.msra.mxu0 %v468
        %490 = vmatprep.subr.mxu0 0.0
        %491 = vmatpush1.msra.mxu0 %v467
        %492 = vmatprep.subr.mxu0 0.0
        %493 = vmatpush1.msra.mxu0 %v466
        %494 = vmatprep.subr.mxu0 0.0
        %495 = vmatpush1.msra.mxu0 %v465
        %496 = vmatprep.subr.mxu0 0.0
        %497 = vmatpush1.msra.mxu0 %v464
        %498 = vmatprep.subr.mxu0 0.0
        %499 = vmatpush1.msra.mxu0 %v463
        %500 = vmatprep.subr.mxu0 0.0
        %501 = vmatpush1.msra.mxu0 %v462
        %502 = vmatprep.subr.mxu0 0.0
        %503 = vmatpush2.msra.mxu0 0.0
        %504 = vmatprep.subr.mxu0 0.0
        %505 = vmatpush2.msra.mxu0 0.0
        %506 = vmatprep.subr.mxu0 0.0
        %507 = vmatpush2.msra.mxu0 0.0
        %508 = vmatprep.subr.mxu0 0.0
        %509 = vmatpush2.msra.mxu0 0.0
        %510 = vmatprep.subr.mxu0 0.0
        %511 = vmatpush2.msra.mxu0 0.0
        %512 = vmatprep.subr.mxu0 0.0
        %513 = vmatpush2.msra.mxu0 0.0
        %514 = vmatprep.subr.mxu0 0.0
        %515 = vmatpush2.msra.mxu0 0.0
        %516 = vmatprep.subr.mxu0 0.0
        %517 = vmatpush2.msra.mxu0 0.0
        %518 = vmatprep.subr.mxu0 0.0
        %519 = vmatpush2.msra.mxu0 0.0
        %520 = vmatprep.subr.mxu0 0.0
        %521 = vmatpush2.msra.mxu0 0.0
        %522 = vmatprep.subr.mxu0 0.0
        %523 = vmatpush2.msra.mxu0 0.0
        %524 = vmatprep.subr.mxu0 0.0
        %525 = vmatpush2.msra.mxu0 0.0
        %526 = vmatprep.subr.mxu0 0.0
        %527 = vmatpush2.msra.mxu0 0.0
        %528 = vmatprep.subr.mxu0 0.0
        %529 = vmatpush2.msra.mxu0 0.0
        %530 = vmatprep.subr.mxu0 0.0
        %531 = vmatpush2.msra.mxu0 0.0
        %532 = vmatprep.subr.mxu0 0.0
        %533 = vmatpush2.msra.mxu0 0.0
        %534 = vmatprep.mubr.f32.mxu0 0.0
        %535 = vmatmul.mubr.f32.gmra.mxu0 %v299
        %v536 = vpop.f32.mrf.mxu0
        %v537 = vadd.f32 0.0, %v536
        %v538 = vpop.f32.mrf.mxu0
        %539 = vmatprep.mubr.f32.mxu0 0.0
        %540 = vmatmul.mubr.f32.gmra.mxu0 %v302
        %v541 = vpop.f32.mrf.mxu0
        %v542 = vadd.f32 0.0, %v541
        %v543 = vpop.f32.mrf.mxu0
        %544 = vdwg.mxu0
        %v545 = vlaneseq
        %v546 = vshrl.u32 %v545, 7
        %v547 = vadd.s32 %v546, 8
        %vm548 = vcmp.lt.s32.totalorder %v546, 0
        %v549 = vsub.s32 0, %v546
        %v550 = vsel %vm548, %v549, %v546
        %v551 = vshrl.u32 %v550, 4
        %v552 = vand.u32 %v550, 15
        %v553 = vsub.s32 0, %v552
        %v554 = vsel %vm548, %v553, %v552
        %vm555 = vcmp.lt.s32.totalorder %v547, 0
        %v556 = vsub.s32 0, %v547
        %v557 = vsel %vm555, %v556, %v547
        %v558 = vshrl.u32 %v557, 4
        %v559 = vand.u32 %v557, 15
        %v560 = vsub.s32 0, %v559
        %v561 = vsel %vm555, %v560, %v559
        %vm562 = vcmp.ne.s32.totalorder %v554, 0
        %vm563 = vcmp.ne.s32.totalorder %v561, 0
        %vm564 = vcmp.lt.s32.totalorder %v554, 0
        %vm565 = vcmp.lt.s32.totalorder %v561, 0
        %vm566 = vmand %vm564, %vm562
        %vm567 = vmand %vm565, %vm563
        %v568 = vadd.s32 %v554, 16
        %v569 = vadd.s32 %v561, 16
        %v570 = vsel %vm566, %v568, %v554
        %v571 = vsel %vm567, %v569, %v561
        %vm572 = vcmp.eq.s32.totalorder %v570, 0
        %vm573 = vcmp.eq.s32.totalorder %v571, 0
        %vm574 = vcmp.eq.s32.totalorder %v570, 15
        %vm575 = vcmp.eq.s32.totalorder %v571, 15
        %v576 = vrot.slane %v371, 7
        %v577 = vrot.slane %v376, 7
        %vm578 = vcmp.lt.s32.totalorder %v546, 1
        %v579 = vsel %vm578, %v576, %v577
        %v580 = vsel %vm578, %v577, %v576
        %v581 = vrot.slane %v371, 1
        %v582 = vrot.slane %v376, 1
        %vm583 = vcmp.lt.s32.totalorder %v546, 7
        %v584 = vsel %vm583, %v581, %v582
        %v585 = vsel %vm583, %v582, %v581
        %v586 = vrot.slane %v537, 1
        %v587 = vrot.slane %v542, 1
        %v588 = vsel %vm583, %v586, %v587
        %v589 = vsel %vm583, %v587, %v586
        %v590 = vrot.slane %v537, 7
        %v591 = vrot.slane %v542, 7
        %v592 = vsel %vm578, %v590, %v591
        %v593 = vsel %vm578, %v591, %v590
        %v594 = vsel %vm572, 1, 0
        %v595 = vsel %vm573, 1, 0
        %vm596 = vcmp.eq.s32.totalorder %v594, 1
        %vm597 = vcmp.eq.s32.totalorder %v595, 1
        %v598 = vsel %vm596, %v584, %v580
        %v599 = vsel %vm597, %v585, %v579
        %v600 = vsel %vm574, 1, 0
        %v601 = vsel %vm575, 1, 0
        %vm602 = vcmp.eq.s32.totalorder %v600, 1
        %vm603 = vcmp.eq.s32.totalorder %v601, 1
        %v604 = vsel %vm602, %v593, %v588
        %v605 = vsel %vm603, %v592, %v589
        %v606 = vadd.f32 %v598, %v454
        %v607 = vadd.f32 %v599, %v459
        %v608 = vadd.f32 %v606, %v604
        %v609 = vadd.f32 %v607, %v605
        %v610 = vld [vmem:[%s4] sm:$0x1]
        %v612 = vlaneseq
        %v613 = vshrl.u32 %v612, 7
        %v614 = vsub.s32 0, %v613
        %v615 = vrot.slane %v610, %v614
        %v617 = vadd.f32 %v608, %v615
        %v618 = vadd.f32 %v609, %v615
        %v619 = vmax.f32 %v617, 0.0
        %v620 = vmax.f32 %v618, 0.0
        %621 = vst [vmem:[%s286] sm:$0xff] %v619
        %622 = vst [vmem:[%s286 + $0x8] sm:$0xff] %v620
        %s623 = sand.u32 %s142, 1
        %s624 = scalar_lea.sflag [#allocation4], %s623
        %s625 = sand.u32 %s142, 1
        %s626 = smul.addr %s625, 16
        %s627 = scalar_lea.vmem [#allocation10], %s626
        // Predicated region
        $region57: #{tpu_custom_call.1} parent=39 // pred_check
          %p628 = pneg %p152
        $region58: #{tpu_custom_call.1} parent=39 // pred_check_branch
          %630 = sbr.rel (%p628) target = $region60
        $region59: #{tpu_custom_call.1} parent=39 // pred_region
          %s632 = ssub.s32 256, 256
          %633 = vsyncadd %s624, %s632
          %s634 = smul.addr %s24, 2
          %s635 = smul.addr %s634, 128
          %s636 = scalar_lea.hbm %s5, %s635
          %s637 = sshll.u32 %s627, 4
          %s638 = int_to_ptr.vmem [resolvable:$true] %s637
          %643 = dma.vmem_to_hbm [thread:$0]  %s638, 256, %s636, %s624, 128, 128, 8
        $region60: #{tpu_custom_call.1} parent=39 // pred_fallthru
          _
      $region40: #{tpu_custom_call.1} parent=5 // pred_fallthru
        _
      %p644 = scmp.le.s32.totalorder 2, %s19
      // Predicated region
      $region61: #{tpu_custom_call.1} parent=5 // pred_check
        %p645 = pneg %p644
      $region62: #{tpu_custom_call.1} parent=5 // pred_check_branch
        %647 = sbr.rel (%p645) target = $region64
      $region63: #{tpu_custom_call.1} parent=5 // pred_region
        %s648 = ssub.s32 %s19, 2
        // Predicated region
        $region65: #{tpu_custom_call.1} parent=63 // pred_check
          %p649 = pneg %p158
        $region66: #{tpu_custom_call.1} parent=63 // pred_check_branch
          %651 = sbr.rel (%p649) target = $region68
        $region67: #{tpu_custom_call.1} parent=63 // pred_region
          %s652 = sand.u32 %s143, 1
          %s653 = scalar_lea.sflag [#allocation4], %s652
          %s654 = sand.u32 %s143, 1
          %s655 = smul.addr %s654, 16
          %s656 = scalar_lea.vmem [#allocation10], %s655
          %657 = dma.done %s653, 256
        $region68: #{tpu_custom_call.1} parent=63 // pred_fallthru
          _
      $region64: #{tpu_custom_call.1} parent=5 // pred_fallthru
        _
    $region6: #{tpu_custom_call.1} parent=1 // loop_footer
      %s23 = sadd.s32 1, %s19
    $region7: #{tpu_custom_call.1} parent=1 // loop_footer_branch
      %18 = sbr.rel target = $region3
    $region8: #{tpu_custom_call.1} parent=1 // loop_exit
      _
    %658 = vsyncpa [#allocation3], 1
    %s659 = scalar_lea.sflag [#allocation3], 1
    %660 = vsyncpa %s659, 1
    %661 = vsyncpa [#allocation6], 1
    %662 = vsyncpa [#allocation9], 1
    %663 = vsyncpa [#allocation4], 1
    %s664 = scalar_lea.sflag [#allocation4], 1
    %665 = vsyncpa %s664, 1

</llo_original>
